<compile_context>
chip_gen: v7x
topology: tpu7x:2x2x1
jax: 0.10.0
libtpu: 0.0.40
codegen_flags: <defaults>
</compile_context>

<pallas_src>
import jax
import jax.numpy as jnp
from jax.experimental import pallas as pl
from jax.experimental.pallas import tpu as pltpu

D_WIDTH = 100          # PyTorch hidden width
H_PAD = 128            # lane-dense hidden width
LN_EPS = 1e-5


def net_kernel(x_ref, w1_ref, b1_ref, g_ref, bln_ref, w2_ref, b2_ref, o_ref):
    # ---- L1: Linear(D_in, 128-padded); cast x to bf16 in-kernel, f32 acc ----
    x = x_ref[...].astype(jnp.bfloat16)
    h = jnp.dot(x, w1_ref[...], preferred_element_type=jnp.float32) + b1_ref[...]
    # W1/b1 pad lanes are 0 -> padded hidden lanes of h are exactly 0.

    # ---- N1: LayerNorm over the 100 real lanes (biased var, eps=1e-5) ----
    # Plain lane sums already equal sums over 100 lanes (pads are 0).
    inv_n = jnp.float32(1.0 / D_WIDTH)
    mean = jnp.sum(h, axis=-1, keepdims=True) * inv_n
    ex2 = jnp.sum(h * h, axis=-1, keepdims=True) * inv_n
    var = ex2 - mean * mean
    hn = (h - mean) * jax.lax.rsqrt(var + LN_EPS) * g_ref[...] + bln_ref[...]
    # gamma/beta pad lanes are 0 -> padded lanes of hn are 0 again.

    # ---- Dropout (identity at inference) + ReLU ----
    hr = jnp.maximum(hn, 0.0)

    # ---- L2: (TB,128) x (128,D_out) narrow logits; f32 accumulate ----
    logits = jnp.dot(hr.astype(jnp.bfloat16), w2_ref[...],
                     preferred_element_type=jnp.float32) + b2_ref[...]

    # ---- Softmax over dim=1 (exact normalization -> exact simplex) ----
    m = jnp.max(logits, axis=-1, keepdims=True)
    e = jnp.exp(logits - m)
    denom = jnp.sum(e, axis=-1, keepdims=True)
    o_ref[...] = (e / denom).astype(o_ref.dtype)


def _round_up(n, m):
    return ((n + m - 1) // m) * m


def prepare_params(w1, b1, gamma, beta, w2, b2):
    """One-time pad/cast of the parameters; call once and reuse every step."""
    d_in = w1.shape[0]
    d_out = w2.shape[1]
    w1p = jnp.zeros((d_in, H_PAD), jnp.bfloat16).at[:, :D_WIDTH].set(
        w1.astype(jnp.bfloat16))
    b1p = jnp.zeros((1, H_PAD), jnp.float32).at[:, :D_WIDTH].set(b1.reshape(1, -1))
    gp = jnp.zeros((1, H_PAD), jnp.float32).at[:, :D_WIDTH].set(gamma.reshape(1, -1))
    btp = jnp.zeros((1, H_PAD), jnp.float32).at[:, :D_WIDTH].set(beta.reshape(1, -1))
    w2p = jnp.zeros((H_PAD, d_out), jnp.bfloat16).at[:D_WIDTH, :].set(
        w2.astype(jnp.bfloat16))
    b2p = b2.reshape(1, d_out).astype(jnp.float32)
    return w1p, b1p, gp, btp, w2p, b2p


@jax.jit
def net_forward(x, w1p, b1p, gp, btp, w2p, b2p):
    """x:(B,D_in) f32; params pre-padded by prepare_params. Returns (B,D_out) f32."""
    B, D_in = x.shape
    D_out = w2p.shape[1]

    # >= 2 batch tiles when B is large so the "parallel" axis can shard across
    # v7x's two TensorCores; tile kept small enough that the x/out double
    # buffers stay far under v7x's 32 MiB scoped VMEM.
    TB = max(8, min(1024, _round_up(pl.cdiv(B, 2), 8)))
    grid = (pl.cdiv(B, TB),)   # partial last block OK: all ops are row-independent

    return pl.pallas_call(
        net_kernel,
        out_shape=jax.ShapeDtypeStruct((B, D_out), jnp.float32),
        grid=grid,
        in_specs=[
            pl.BlockSpec((TB, D_in), lambda i: (i, 0)),      # x batch tile (f32)
            pl.BlockSpec((D_in, H_PAD), lambda i: (0, 0)),   # W1 (VMEM-resident)
            pl.BlockSpec((1, H_PAD), lambda i: (0, 0)),      # b1
            pl.BlockSpec((1, H_PAD), lambda i: (0, 0)),      # gamma
            pl.BlockSpec((1, H_PAD), lambda i: (0, 0)),      # beta
            pl.BlockSpec((H_PAD, D_out), lambda i: (0, 0)),  # W2 (VMEM-resident)
            pl.BlockSpec((1, D_out), lambda i: (0, 0)),      # b2
        ],
        out_specs=pl.BlockSpec((TB, D_out), lambda i: (i, 0)),  # narrow writeback
        compiler_params=pltpu.CompilerParams(
            dimension_semantics=("parallel",),     # megacore sharding on v7x
            vmem_limit_bytes=32 * 1024 * 1024,     # sized for v7x's budget
        ),
    )(x, w1p, b1p, gp, btp, w2p, b2p)


def init_params(key, d_in, d_out):
    """PyTorch-like init; weights stored transposed (in, out)."""
    k1, k2, k3, k4 = jax.random.split(key, 4)
    lim1 = 1.0 / jnp.sqrt(d_in)
    lim2 = 1.0 / jnp.sqrt(D_WIDTH)
    w1 = jax.random.uniform(k1, (d_in, D_WIDTH), jnp.float32, -lim1, lim1)
    b1 = jax.random.uniform(k2, (D_WIDTH,), jnp.float32, -lim1, lim1)
    gamma = jnp.ones((D_WIDTH,), jnp.float32)    # LayerNorm weight
    beta = jnp.zeros((D_WIDTH,), jnp.float32)    # LayerNorm bias
    w2 = jax.random.uniform(k3, (D_WIDTH, d_out), jnp.float32, -lim2, lim2)
    b2 = jax.random.uniform(k4, (d_out,), jnp.float32, -lim2, lim2)
    return w1, b1, gamma, beta, w2, b2


if __name__ == "__main__":
    B, D_in, D_out = 8, 32, 4   # small shapes consistent with the module
    key = jax.random.PRNGKey(0)
    kx, kp = jax.random.split(key)
    x = jax.random.normal(kx, (B, D_in), jnp.float32)
    params = init_params(kp, D_in, D_out)
    prepped = prepare_params(*params)     # one-time padding/casting

    out = jax.block_until_ready(net_forward(x, *prepped))
    w1, b1, gamma, beta, w2, b2 = params

    # -- Reference 1: exact f32 PyTorch semantics (loose tol: kernel uses bf16 matmuls) --
    h = x @ w1 + b1
    mu = h.mean(-1, keepdims=True)
    var = ((h - mu) ** 2).mean(-1, keepdims=True)
    h = jnp.maximum((h - mu) / jnp.sqrt(var + LN_EPS) * gamma + beta, 0.0)
    ref_f32 = jax.nn.softmax(h @ w2 + b2, axis=1)

    # -- Reference 2: bf16-matmul-aware reference (tight tol) --
    hb = jnp.dot(x.astype(jnp.bfloat16), w1.astype(jnp.bfloat16),
                 preferred_element_type=jnp.float32) + b1
    mu = hb.mean(-1, keepdims=True)
    var = ((hb - mu) ** 2).mean(-1, keepdims=True)
    hb = jnp.maximum((hb - mu) / jnp.sqrt(var + LN_EPS) * gamma + beta, 0.0)
    lg = jnp.dot(hb.astype(jnp.bfloat16), w2.astype(jnp.bfloat16),
                 preferred_element_type=jnp.float32) + b2
    ref_bf16 = jax.nn.softmax(lg, axis=1)

    assert out.shape == (B, D_out)
    assert jnp.allclose(out, ref_f32, atol=2e-2), "mismatch vs f32 reference"
    assert jnp.allclose(out, ref_bf16, atol=2e-3), "mismatch vs bf16-aware reference"
    assert jnp.allclose(out.sum(axis=1), 1.0, atol=1e-5)
    print("KERNEL_OK")
</pallas_src>

<mosaic_0001>
module attributes {stable_mosaic.version = 11 : i64} {
  func.func @net_kernel(%arg0: i32, %arg1: memref<8x32xf32, #tpu.memory_space<vmem>>, %arg2: memref<32x128xbf16, #tpu.memory_space<vmem>>, %arg3: memref<1x128xf32, #tpu.memory_space<vmem>>, %arg4: memref<1x128xf32, #tpu.memory_space<vmem>>, %arg5: memref<1x128xf32, #tpu.memory_space<vmem>>, %arg6: memref<128x4xbf16, #tpu.memory_space<vmem>>, %arg7: memref<1x4xf32, #tpu.memory_space<vmem>>, %arg8: memref<8x4xf32, #tpu.memory_space<vmem>>) attributes {dimension_semantics = [#tpu.dimension_semantics<parallel>], iteration_bounds = array<i64: 1>, scalar_prefetch = 0 : i64, scratch_operands = 0 : i64, tpu.core_type = #tpu.core_type<tc>, window_params = [{transform_indices = @transform_0, window_bounds = array<i64: 8, 32>}, {pipeline_mode = #tpu.pipeline_mode<synchronous>, transform_indices = @transform_1, window_bounds = array<i64: 32, 128>}, {pipeline_mode = #tpu.pipeline_mode<synchronous>, transform_indices = @transform_2, window_bounds = array<i64: 1, 128>}, {pipeline_mode = #tpu.pipeline_mode<synchronous>, transform_indices = @transform_3, window_bounds = array<i64: 1, 128>}, {pipeline_mode = #tpu.pipeline_mode<synchronous>, transform_indices = @transform_4, window_bounds = array<i64: 1, 128>}, {pipeline_mode = #tpu.pipeline_mode<synchronous>, transform_indices = @transform_5, window_bounds = array<i64: 128, 4>}, {pipeline_mode = #tpu.pipeline_mode<synchronous>, transform_indices = @transform_6, window_bounds = array<i64: 1, 4>}, {transform_indices = @transform_7, window_bounds = array<i64: 8, 4>}]} {
    %c0 = arith.constant 0 : index
    %c0_0 = arith.constant 0 : index
    %0 = vector.load %arg1[%c0, %c0_0] : memref<8x32xf32, #tpu.memory_space<vmem>>, vector<8x32xf32>
    %1 = arith.truncf %0 : vector<8x32xf32> to vector<8x32xbf16>
    %c0_1 = arith.constant 0 : index
    %c0_2 = arith.constant 0 : index
    %2 = vector.load %arg2[%c0_1, %c0_2] : memref<32x128xbf16, #tpu.memory_space<vmem>>, vector<32x128xbf16>
    %cst = arith.constant dense<0.000000e+00> : vector<8x128xf32>
    %3 = tpu.matmul %1, %2, %cst {dimension_numbers = #tpu.dot_dimension_numbers<[1], [0], [0], [1], [0, 0, 1, 1], [], []>} : vector<8x32xbf16>, vector<32x128xbf16>, vector<8x128xf32> -> vector<8x128xf32>
    %c0_3 = arith.constant 0 : index
    %c0_4 = arith.constant 0 : index
    %4 = vector.load %arg3[%c0_3, %c0_4] : memref<1x128xf32, #tpu.memory_space<vmem>>, vector<1x128xf32>
    %5 = vector.broadcast %4 : vector<1x128xf32> to vector<8x128xf32>
    %6 = arith.addf %3, %5 : vector<8x128xf32>
    %cst_5 = arith.constant dense<0.000000e+00> : vector<8xf32>
    %7 = vector.multi_reduction <add>, %6, %cst_5 [1] : vector<8x128xf32> to vector<8xf32>
    %8 = vector.shape_cast %7 : vector<8xf32> to vector<8x1xf32>
    %cst_6 = arith.constant 0.00999999977 : f32
    %9 = vector.broadcast %cst_6 : f32 to vector<8x1xf32>
    %10 = arith.mulf %8, %9 : vector<8x1xf32>
    %11 = arith.mulf %6, %6 : vector<8x128xf32>
    %cst_7 = arith.constant dense<0.000000e+00> : vector<8xf32>
    %12 = vector.multi_reduction <add>, %11, %cst_7 [1] : vector<8x128xf32> to vector<8xf32>
    %13 = vector.shape_cast %12 : vector<8xf32> to vector<8x1xf32>
    %cst_8 = arith.constant 0.00999999977 : f32
    %14 = vector.broadcast %cst_8 : f32 to vector<8x1xf32>
    %15 = arith.mulf %13, %14 : vector<8x1xf32>
    %16 = arith.mulf %10, %10 : vector<8x1xf32>
    %17 = arith.subf %15, %16 : vector<8x1xf32>
    %18 = vector.broadcast %10 : vector<8x1xf32> to vector<8x128xf32>
    %19 = arith.subf %6, %18 : vector<8x128xf32>
    %cst_9 = arith.constant 9.99999974E-6 : f32
    %20 = vector.broadcast %cst_9 : f32 to vector<8x1xf32>
    %21 = arith.addf %17, %20 : vector<8x1xf32>
    %22 = math.rsqrt %21 : vector<8x1xf32>
    %23 = vector.broadcast %22 : vector<8x1xf32> to vector<8x128xf32>
    %24 = arith.mulf %19, %23 : vector<8x128xf32>
    %c0_10 = arith.constant 0 : index
    %c0_11 = arith.constant 0 : index
    %25 = vector.load %arg4[%c0_10, %c0_11] : memref<1x128xf32, #tpu.memory_space<vmem>>, vector<1x128xf32>
    %26 = vector.broadcast %25 : vector<1x128xf32> to vector<8x128xf32>
    %27 = arith.mulf %24, %26 : vector<8x128xf32>
    %c0_12 = arith.constant 0 : index
    %c0_13 = arith.constant 0 : index
    %28 = vector.load %arg5[%c0_12, %c0_13] : memref<1x128xf32, #tpu.memory_space<vmem>>, vector<1x128xf32>
    %29 = vector.broadcast %28 : vector<1x128xf32> to vector<8x128xf32>
    %30 = arith.addf %27, %29 : vector<8x128xf32>
    %cst_14 = arith.constant 0.000000e+00 : f32
    %31 = vector.broadcast %cst_14 : f32 to vector<8x128xf32>
    %32 = arith.maximumf %30, %31 : vector<8x128xf32>
    %33 = arith.truncf %32 : vector<8x128xf32> to vector<8x128xbf16>
    %c0_15 = arith.constant 0 : index
    %c0_16 = arith.constant 0 : index
    %34 = vector.load %arg6[%c0_15, %c0_16] : memref<128x4xbf16, #tpu.memory_space<vmem>>, vector<128x4xbf16>
    %cst_17 = arith.constant dense<0.000000e+00> : vector<8x4xf32>
    %35 = tpu.matmul %33, %34, %cst_17 {dimension_numbers = #tpu.dot_dimension_numbers<[1], [0], [0], [1], [0, 0, 1, 1], [], []>} : vector<8x128xbf16>, vector<128x4xbf16>, vector<8x4xf32> -> vector<8x4xf32>
    %c0_18 = arith.constant 0 : index
    %c0_19 = arith.constant 0 : index
    %36 = vector.load %arg7[%c0_18, %c0_19] : memref<1x4xf32, #tpu.memory_space<vmem>>, vector<1x4xf32>
    %37 = vector.broadcast %36 : vector<1x4xf32> to vector<8x4xf32>
    %38 = arith.addf %35, %37 : vector<8x4xf32>
    %cst_20 = arith.constant dense<0xFF800000> : vector<8xf32>
    %39 = vector.multi_reduction <maximumf>, %38, %cst_20 [1] : vector<8x4xf32> to vector<8xf32>
    %40 = vector.shape_cast %39 : vector<8xf32> to vector<8x1xf32>
    %41 = vector.broadcast %40 : vector<8x1xf32> to vector<8x4xf32>
    %42 = arith.subf %38, %41 : vector<8x4xf32>
    %43 = math.exp %42 : vector<8x4xf32>
    %cst_21 = arith.constant dense<0.000000e+00> : vector<8xf32>
    %44 = vector.multi_reduction <add>, %43, %cst_21 [1] : vector<8x4xf32> to vector<8xf32>
    %45 = vector.shape_cast %44 : vector<8xf32> to vector<8x1xf32>
    %46 = vector.broadcast %45 : vector<8x1xf32> to vector<8x4xf32>
    %47 = arith.divf %43, %46 : vector<8x4xf32>
    %c0_22 = arith.constant 0 : index
    %c0_23 = arith.constant 0 : index
    %48 = vector.load %arg8[%c0_22, %c0_23] : memref<8x4xf32, #tpu.memory_space<vmem>>, vector<8x4xf32>
    tpu.vector_store %arg8[%c0_22, %c0_23], %47 {strides = array<i32>} : memref<8x4xf32, #tpu.memory_space<vmem>>, vector<8x4xf32>,
    return
  }
  func.func @transform_0(%arg0: i32) -> (i32, i32) {
    %c0_i32 = arith.constant 0 : i32
    %c0_i32_0 = arith.constant 0 : i32
    return %arg0, %c0_i32 : i32, i32
  }
  func.func @transform_1(%arg0: i32) -> (i32, i32) {
    %c0_i32 = arith.constant 0 : i32
    %c0_i32_0 = arith.constant 0 : i32
    %c0_i32_1 = arith.constant 0 : i32
    return %c0_i32, %c0_i32_0 : i32, i32
  }
  func.func @transform_2(%arg0: i32) -> (i32, i32) {
    %c0_i32 = arith.constant 0 : i32
    %c0_i32_0 = arith.constant 0 : i32
    %c0_i32_1 = arith.constant 0 : i32
    return %c0_i32, %c0_i32_0 : i32, i32
  }
  func.func @transform_3(%arg0: i32) -> (i32, i32) {
    %c0_i32 = arith.constant 0 : i32
    %c0_i32_0 = arith.constant 0 : i32
    %c0_i32_1 = arith.constant 0 : i32
    return %c0_i32, %c0_i32_0 : i32, i32
  }
  func.func @transform_4(%arg0: i32) -> (i32, i32) {
    %c0_i32 = arith.constant 0 : i32
    %c0_i32_0 = arith.constant 0 : i32
    %c0_i32_1 = arith.constant 0 : i32
    return %c0_i32, %c0_i32_0 : i32, i32
  }
  func.func @transform_5(%arg0: i32) -> (i32, i32) {
    %c0_i32 = arith.constant 0 : i32
    %c0_i32_0 = arith.constant 0 : i32
    %c0_i32_1 = arith.constant 0 : i32
    return %c0_i32, %c0_i32_0 : i32, i32
  }
  func.func @transform_6(%arg0: i32) -> (i32, i32) {
    %c0_i32 = arith.constant 0 : i32
    %c0_i32_0 = arith.constant 0 : i32
    %c0_i32_1 = arith.constant 0 : i32
    return %c0_i32, %c0_i32_0 : i32, i32
  }
  func.func @transform_7(%arg0: i32) -> (i32, i32) {
    %c0_i32 = arith.constant 0 : i32
    %c0_i32_0 = arith.constant 0 : i32
    return %arg0, %c0_i32 : i32, i32
  }
}

</mosaic_0001>

<llo_original>
// kernel: net_forward.1
$region0: #{net_forward.1}
  #allocation0 [shape = 'u32[]', space=smem, size = 0x4, offset = 0x4, fixed_abs, tag = 'smem constant byte address 0x4 - core index']
  #allocation1 [shape = 'u32[144,128]{1,0:T(1,128)}', space=vmem, size = 0x12000, scoped, tag = 'internal scratch']
  %s0 = inlined_call_operand.vmem [shape: f32[8,32], index: 0, kind: input, shape index: {}]
  %s1 = inlined_call_operand.vmem [shape: bf16[32,128], index: 1, kind: input, shape index: {}]
  %s2 = inlined_call_operand.vmem [shape: f32[1,128], index: 2, kind: input, shape index: {}]
  %s3 = inlined_call_operand.vmem [shape: f32[1,128], index: 3, kind: input, shape index: {}]
  %s4 = inlined_call_operand.vmem [shape: f32[1,128], index: 4, kind: input, shape index: {}]
  %s5 = inlined_call_operand.vmem [shape: bf16[128,4], index: 5, kind: input, shape index: {}]
  %s6 = inlined_call_operand.vmem [shape: f32[1,4], index: 6, kind: input, shape index: {}]
  %s7 = inlined_call_operand.vmem [shape: f32[8,4], index: 7, kind: output, shape index: {}]
  %s8 = sld [smem:[#allocation0]]
  $region38: #{net_forward.1} parent=0
    _
  %s10 = ssub.s32 1, %s8
  %s11 = scalar_select 0, %s10, %s8
  // Predicated region
  $region2: #{net_forward.1} parent=0 // pred_check
    _
  $region3: #{net_forward.1} parent=0 // pred_check_branch
    %13 = sbr.rel (0) target = $region5
  $region4: #{net_forward.1} parent=0 // pred_region
    _
  $region5: #{net_forward.1} parent=0 // pred_fallthru
    _
  // Predicated region
  $region6: #{net_forward.1} parent=0 // pred_check
    _
  $region7: #{net_forward.1} parent=0 // pred_check_branch
    %15 = sbr.rel (0) target = $region9
  $region8: #{net_forward.1} parent=0 // pred_region
    _
  $region9: #{net_forward.1} parent=0 // pred_fallthru
    _
  // Predicated region
  $region10: #{net_forward.1} parent=0 // pred_check
    _
  $region11: #{net_forward.1} parent=0 // pred_check_branch
    %17 = sbr.rel (0) target = $region13
  $region12: #{net_forward.1} parent=0 // pred_region
    _
  $region13: #{net_forward.1} parent=0 // pred_fallthru
    _
  // Predicated region
  $region14: #{net_forward.1} parent=0 // pred_check
    _
  $region15: #{net_forward.1} parent=0 // pred_check_branch
    %19 = sbr.rel (0) target = $region17
  $region16: #{net_forward.1} parent=0 // pred_region
    _
  $region17: #{net_forward.1} parent=0 // pred_fallthru
    _
  // Predicated region
  $region18: #{net_forward.1} parent=0 // pred_check
    _
  $region19: #{net_forward.1} parent=0 // pred_check_branch
    %21 = sbr.rel (0) target = $region21
  $region20: #{net_forward.1} parent=0 // pred_region
    _
  $region21: #{net_forward.1} parent=0 // pred_fallthru
    _
  // Predicated region
  $region22: #{net_forward.1} parent=0 // pred_check
    _
  $region23: #{net_forward.1} parent=0 // pred_check_branch
    %23 = sbr.rel (0) target = $region25
  $region24: #{net_forward.1} parent=0 // pred_region
    _
  $region25: #{net_forward.1} parent=0 // pred_fallthru
    _
  // Predicated region
  $region26: #{net_forward.1} parent=0 // pred_check
    _
  $region27: #{net_forward.1} parent=0 // pred_check_branch
    %25 = sbr.rel (0) target = $region29
  $region28: #{net_forward.1} parent=0 // pred_region
    _
  $region29: #{net_forward.1} parent=0 // pred_fallthru
    _
  %v27 = vld [vmem:[%s0] sm:$0xff]
  %v28 = vpack.c.bf16 %v27, %v27
  %v29 = vld [vmem:[%s1] sm:$0xf]
  %v30 = vld [vmem:[%s1 + $0x4] sm:$0xf]
  %v31 = vld [vmem:[%s1 + $0x8] sm:$0xf]
  %v32 = vld [vmem:[%s1 + $0xc] sm:$0xf]
  %v33 = vld [vmem:[%s2] sm:$0x1]
  %v35 = vlaneseq
  %v36 = vshrl.u32 %v35, 7
  %v37 = vsub.s32 0, %v36
  %v38 = vrot.slane %v33, %v37
  %v44 = vunpack.c.l.b16 %v29
  %v45 = vunpack.c.l.b16 %v30
  %v46 = vunpack.c.l.b16 %v31
  %v47 = vunpack.c.l.b16 %v32
  %v48 = vpack.c.b16 %v45, %v44
  %v49 = vpack.c.b16 %v47, %v46
  %vm52 = vcmask 261120
  %v54 = vsel %vm52, %v28, 0
  %56 = vmatprep.subr.bf16.mxu0 0
  %57 = vmatpush1.bf16.msra.mxu0 %v48
  %58 = vmatprep.subr.bf16.mxu0 0
  %59 = vmatpush1.bf16.msra.mxu0 %v49
  %60 = vmatprep.subr.bf16.mxu0 0
  %61 = vmatpush1.bf16.msra.mxu0 0
  %62 = vmatprep.subr.bf16.mxu0 0
  %63 = vmatpush1.bf16.msra.mxu0 0
  %64 = vmatprep.subr.bf16.mxu0 0
  %65 = vmatpush1.bf16.msra.mxu0 0
  %66 = vmatprep.subr.bf16.mxu0 0
  %67 = vmatpush1.bf16.msra.mxu0 0
  %68 = vmatprep.subr.bf16.mxu0 0
  %69 = vmatpush1.bf16.msra.mxu0 0
  %70 = vmatprep.subr.bf16.mxu0 0
  %71 = vmatpush1.bf16.msra.mxu0 0
  %72 = vmatprep.subr.bf16.mxu0 0
  %73 = vmatpush1.bf16.msra.mxu0 0
  %74 = vmatprep.subr.bf16.mxu0 0
  %75 = vmatpush1.bf16.msra.mxu0 0
  %76 = vmatprep.subr.bf16.mxu0 0
  %77 = vmatpush1.bf16.msra.mxu0 0
  %78 = vmatprep.subr.bf16.mxu0 0
  %79 = vmatpush1.bf16.msra.mxu0 0
  %80 = vmatprep.subr.bf16.mxu0 0
  %81 = vmatpush1.bf16.msra.mxu0 0
  %82 = vmatprep.subr.bf16.mxu0 0
  %83 = vmatpush1.bf16.msra.mxu0 0
  %84 = vmatprep.subr.bf16.mxu0 0
  %85 = vmatpush1.bf16.msra.mxu0 0
  %86 = vmatprep.subr.bf16.mxu0 0
  %87 = vmatpush1.bf16.msra.mxu0 0
  %88 = vmatprep.mubr.bf16.mxu0 0
  %89 = vmatmul.mubr.bf16.gmra.mrb[0].mxu0 %v54
  %v90 = vpop.f32.mrb[0].mxu0
  %v91 = vadd.f32 %v38, %v90
  %v92 = vpop.f32.mrb[0].mxu0
  %v93 = vpop.f32.mrb[0].mxu0
  %v94 = vpop.f32.mrb[0].mxu0
  %95 = vdwg.mxu0
  %96 = vadd.xlane.f32.xlu0 %v91
  %v97 = vpop.xlane.xlu0 %96
  %v98 = vmul.f32 %v97, 0.01
  %v99 = vmul.f32 %v91, %v91
  %100 = vadd.xlane.f32.xlu0 %v99
  %v101 = vpop.xlane.xlu0 %100
  %v102 = vmul.f32 %v101, 0.01
  %v103 = vmul.f32 %v98, %v98
  %v104 = vsub.f32 %v102, %v103
  %v105 = vsub.f32 %v91, %v98
  %v106 = vadd.f32 %v104, 1e-05
  %v107 = vrsqrt.pop %v106
  %v108 = vmul.f32 %v105, %v107
  %v109 = vld [vmem:[%s3] sm:$0x1]
  %v111 = vlaneseq
  %v112 = vshrl.u32 %v111, 7
  %v113 = vsub.s32 0, %v112
  %v114 = vrot.slane %v109, %v113
  %v116 = vmul.f32 %v108, %v114
  %v117 = vld [vmem:[%s4] sm:$0x1]
  %v119 = vlaneseq
  %v120 = vshrl.u32 %v119, 7
  %v121 = vsub.s32 0, %v120
  %v122 = vrot.slane %v117, %v121
  %v124 = vadd.f32 %v116, %v122
  %v125 = vmax.f32 %v124, 0.0
  %v126 = vpack.c.bf16 %v125, %v125
  %v127 = vld [vmem:[%s5] sm:$0xf]
  %v128 = vld [vmem:[%s5 + $0x4] sm:$0xf]
  %v129 = vld [vmem:[%s5 + $0x8] sm:$0xf]
  %v130 = vld [vmem:[%s5 + $0xc] sm:$0xf]
  %v131 = vld [vmem:[%s5 + $0x10] sm:$0xf]
  %v132 = vld [vmem:[%s5 + $0x14] sm:$0xf]
  %v133 = vld [vmem:[%s5 + $0x18] sm:$0xf]
  %v134 = vld [vmem:[%s5 + $0x1c] sm:$0xf]
  %v135 = vld [vmem:[%s5 + $0x20] sm:$0xf]
  %v136 = vld [vmem:[%s5 + $0x24] sm:$0xf]
  %v137 = vld [vmem:[%s5 + $0x28] sm:$0xf]
  %v138 = vld [vmem:[%s5 + $0x2c] sm:$0xf]
  %v139 = vld [vmem:[%s5 + $0x30] sm:$0xf]
  %v140 = vld [vmem:[%s5 + $0x34] sm:$0xf]
  %v141 = vld [vmem:[%s5 + $0x38] sm:$0xf]
  %v142 = vld [vmem:[%s5 + $0x3c] sm:$0xf]
  %v143 = vld [vmem:[%s6] sm:$0x1]
  %v145 = vlaneseq
  %v146 = vshrl.u32 %v145, 7
  %v147 = vsub.s32 0, %v146
  %v148 = vrot.slane %v143, %v147
  %v166 = vunpack.c.l.b16 %v127
  %v167 = vunpack.c.l.b16 %v128
  %v168 = vunpack.c.l.b16 %v129
  %v169 = vunpack.c.l.b16 %v130
  %v170 = vunpack.c.l.b16 %v131
  %v171 = vunpack.c.l.b16 %v132
  %v172 = vunpack.c.l.b16 %v133
  %v173 = vunpack.c.l.b16 %v134
  %v174 = vunpack.c.l.b16 %v135
  %v175 = vunpack.c.l.b16 %v136
  %v176 = vunpack.c.l.b16 %v137
  %v177 = vunpack.c.l.b16 %v138
  %v178 = vunpack.c.l.b16 %v139
  %v179 = vunpack.c.l.b16 %v140
  %v180 = vunpack.c.l.b16 %v141
  %v181 = vunpack.c.l.b16 %v142
  %v182 = vpack.c.b16 %v167, %v166
  %v183 = vpack.c.b16 %v169, %v168
  %v184 = vpack.c.b16 %v171, %v170
  %v185 = vpack.c.b16 %v173, %v172
  %v186 = vpack.c.b16 %v175, %v174
  %v187 = vpack.c.b16 %v177, %v176
  %v188 = vpack.c.b16 %v179, %v178
  %v189 = vpack.c.b16 %v181, %v180
  %198 = vmatprep.subr.bf16.mxu0 0
  %199 = vmatpush1.bf16.msra.mxu0 %v182
  %200 = vmatprep.subr.bf16.mxu0 0
  %201 = vmatpush1.bf16.msra.mxu0 %v183
  %202 = vmatprep.subr.bf16.mxu0 0
  %203 = vmatpush1.bf16.msra.mxu0 %v184
  %204 = vmatprep.subr.bf16.mxu0 0
  %205 = vmatpush1.bf16.msra.mxu0 %v185
  %206 = vmatprep.subr.bf16.mxu0 0
  %207 = vmatpush1.bf16.msra.mxu0 %v186
  %208 = vmatprep.subr.bf16.mxu0 0
  %209 = vmatpush1.bf16.msra.mxu0 %v187
  %210 = vmatprep.subr.bf16.mxu0 0
  %211 = vmatpush1.bf16.msra.mxu0 %v188
  %212 = vmatprep.subr.bf16.mxu0 0
  %213 = vmatpush1.bf16.msra.mxu0 %v189
  %214 = vmatprep.subr.bf16.mxu0 0
  %215 = vmatpush1.bf16.msra.mxu0 0
  %216 = vmatprep.subr.bf16.mxu0 0
  %217 = vmatpush1.bf16.msra.mxu0 0
  %218 = vmatprep.subr.bf16.mxu0 0
  %219 = vmatpush1.bf16.msra.mxu0 0
  %220 = vmatprep.subr.bf16.mxu0 0
  %221 = vmatpush1.bf16.msra.mxu0 0
  %222 = vmatprep.subr.bf16.mxu0 0
  %223 = vmatpush1.bf16.msra.mxu0 0
  %224 = vmatprep.subr.bf16.mxu0 0
  %225 = vmatpush1.bf16.msra.mxu0 0
  %226 = vmatprep.subr.bf16.mxu0 0
  %227 = vmatpush1.bf16.msra.mxu0 0
  %228 = vmatprep.subr.bf16.mxu0 0
  %229 = vmatpush1.bf16.msra.mxu0 0
  %230 = vmatprep.mubr.bf16.mxu0 0
  %231 = vmatmul.mubr.bf16.gmra.mrb[0].mxu0 %v126
  %v232 = vpop.f32.mrb[0].mxu0
  %v233 = vadd.f32 %v148, %v232
  %v234 = vpop.f32.mrb[0].mxu0
  %v235 = vpop.f32.mrb[0].mxu0
  %v236 = vpop.f32.mrb[0].mxu0
  %237 = vdwg.mxu0
  %vm238 = vcmask 31744
  %v239 = vsel %vm238, %v233, -inf
  %240 = vmax.xlane.f32.xlu0 %v239
  %v241 = vpop.xlane.xlu0 %240
  %v242 = vsub.f32 %v233, %v241
  %v243 = vmul.f32 %v242, 1.442695
  %v244 = vpow.pop %v243
  %v245 = vsel %vm238, %v244, 0.0
  %246 = vadd.xlane.f32.xlu0 %v245
  %v247 = vpop.xlane.xlu0 %246
  %v248 = vrcp.pop %v247
  %v249 = vmul.f32 %v244, %v248
  %250 = vst.msk [vmem:[%s7] sm:$0xff] %vm238, %v249
  // Predicated region
  $region30: #{net_forward.1} parent=0 // pred_check
    _
  $region31: #{net_forward.1} parent=0 // pred_check_branch
    %252 = sbr.rel (0) target = $region33
  $region32: #{net_forward.1} parent=0 // pred_region
    _
  $region33: #{net_forward.1} parent=0 // pred_fallthru
    _
  // Predicated region
  $region34: #{net_forward.1} parent=0 // pred_check
    _
  $region35: #{net_forward.1} parent=0 // pred_check_branch
    %254 = sbr.rel (0) target = $region37
  $region36: #{net_forward.1} parent=0 // pred_region
    _
  $region37: #{net_forward.1} parent=0 // pred_fallthru
    _

</llo_original>
